<compile_context>
chip_gen: v6e
topology: v6e:2x2x1
jax: 0.10.0
libtpu: 0.0.40
codegen_flags: <defaults>
</compile_context>

<pallas_src>
import jax
import jax.numpy as jnp
from jax.experimental import pallas as pl
from jax.experimental.pallas import tpu as pltpu


def _round_up(a, b):
    return (a + b - 1) // b * b


def _round_down(a, b):
    return a // b * b


def _avg_pool_kernel(x_ref, mask_ref, o_ref, sum_ref, cnt_ref):
    # x_ref:    (TN, TS, D)  input block
    # mask_ref: (TN, TS)     mask block (native dtype)
    # o_ref:    (TN, D)      output block, resident across the S grid axis
    # sum_ref:  (TN, D)      f32 accumulator scratch
    # cnt_ref:  (TN, 1)      f32 count scratch
    k = pl.program_id(1)

    @pl.when(k == 0)
    def _init():
        sum_ref[...] = jnp.zeros_like(sum_ref)
        cnt_ref[...] = jnp.zeros_like(cnt_ref)

    x = x_ref[...].astype(jnp.float32)              # accumulate in f32 (bf16-safe)
    m = mask_ref[...]

    # masked_fill_(mask == 0, 0)
    keep = (m != 0).astype(jnp.float32)             # (TN, TS)
    sum_ref[...] += jnp.sum(x * keep[:, :, None], axis=1)                    # (TN, D)
    # x_num = sum(mask == 1) (matches PyTorch's eq(1) exactly)
    cnt_ref[...] += jnp.sum((m == 1).astype(jnp.float32), axis=1, keepdims=True)

    @pl.when(k == pl.num_programs(1) - 1)
    def _finalize():
        cnt = jnp.maximum(cnt_ref[...], 1.0)        # clamp(min=1)
        o_ref[...] = (sum_ref[...] / cnt).astype(o_ref.dtype)


def _choose_tiles(N, S, D, itemsize, x_block_budget=8 << 20):
    """Pick (tile_n, tile_s) so one double-buffered x block stays within budget."""
    # Conservative VMEM footprint: last dim padded to 128 lanes, 2nd-to-last to
    # 8 sublanes (Mosaic (8,128) vreg tiling), so small D doesn't overshoot.
    d_eff = _round_up(D, 128)
    s_eff = _round_up(S, 8)
    row_bytes = s_eff * d_eff * itemsize
    tn = _round_down(x_block_budget // max(row_bytes, 1), 8)
    if tn >= 8:
        tile_n = int(max(8, min(tn, 1024, _round_up(N, 8))))
        tile_s = S
    else:
        # S*D too large for one block: tile the reduction (S) axis as well.
        tile_n = 8
        ts = _round_down(x_block_budget // (8 * d_eff * itemsize), 128)
        tile_s = int(min(max(128, ts), _round_up(S, 128)))
        # TODO(synk): also tile D if a single (8, 128, D) block still overflows VMEM.
    return tile_n, tile_s


def average_pooling(x, x_mask):
    """x: (N, S, D) float array; x_mask: (N, S) 0/1 mask (any numeric dtype).

    Returns (N, D), matching the PyTorch AveragePooling.forward semantics.
    """
    N, S, D = x.shape
    assert x_mask.shape == (N, S)

    tile_n, tile_s = _choose_tiles(N, S, D, x.dtype.itemsize)

    n_pad = _round_up(N, tile_n)
    s_pad = _round_up(S, tile_s) if tile_s != S else S
    if n_pad != N or s_pad != S:
        # Zero-padded rows/subitems carry mask == 0, so they contribute nothing.
        x = jnp.pad(x, ((0, n_pad - N), (0, s_pad - S), (0, 0)))
        x_mask = jnp.pad(x_mask, ((0, n_pad - N), (0, s_pad - S)))

    grid = (n_pad // tile_n, s_pad // tile_s)

    out = pl.pallas_call(
        _avg_pool_kernel,
        out_shape=jax.ShapeDtypeStruct((n_pad, D), x.dtype),
        grid_spec=pltpu.PrefetchScalarGridSpec(
            num_scalar_prefetch=0,
            grid=grid,
            in_specs=[
                pl.BlockSpec((tile_n, tile_s, D), lambda i, k: (i, k, 0)),
                pl.BlockSpec((tile_n, tile_s), lambda i, k: (i, k)),
            ],
            out_specs=pl.BlockSpec((tile_n, D), lambda i, k: (i, 0)),
            scratch_shapes=[
                pltpu.VMEM((tile_n, D), jnp.float32),
                pltpu.VMEM((tile_n, 1), jnp.float32),
            ],
        ),
        compiler_params=pltpu.CompilerParams(
            dimension_semantics=("parallel", "arbitrary"),
            vmem_limit_bytes=32 << 20,
        ),
    )(x, x_mask)

    return out[:N] if n_pad != N else out


def _reference(x, x_mask):
    """Pure-JAX reference mirroring the PyTorch forward."""
    keep = (x_mask != 0).astype(x.dtype)[:, :, None]
    x_sum = jnp.sum(x * keep, axis=1)
    x_num = jnp.sum((x_mask == 1).astype(jnp.float32), axis=1, keepdims=True)
    x_num = jnp.maximum(x_num, 1.0)
    return x_sum / x_num.astype(x.dtype)


if __name__ == "__main__":
    key = jax.random.PRNGKey(0)
    kx, km = jax.random.split(key)

    N, S, D = 16, 8, 32  # num_items x max_subitem_size x input_size
    x = jax.random.normal(kx, (N, S, D), dtype=jnp.float32)
    # 0/1 mask; include a fully-masked row to exercise the clamp(min=1) path
    x_mask = (jax.random.uniform(km, (N, S)) > 0.4).astype(jnp.float32)
    x_mask = x_mask.at[0].set(0.0)

    out = average_pooling(x, x_mask)
    out = jax.block_until_ready(out)

    ref = _reference(x, x_mask)
    assert out.shape == (N, D)
    assert jnp.allclose(out, ref, atol=1e-5, rtol=1e-5)

    print("KERNEL_OK")
</pallas_src>

<mosaic_0001>
module attributes {stable_mosaic.version = 11 : i64} {
  func.func @_avg_pool_kernel(%arg0: i32, %arg1: i32, %arg2: memref<16x8x32xf32, #tpu.memory_space<vmem>>, %arg3: memref<16x8xf32, #tpu.memory_space<vmem>>, %arg4: memref<16x32xf32, #tpu.memory_space<vmem>>, %arg5: memref<16x32xf32, #tpu.memory_space<vmem>>, %arg6: memref<16x1xf32, #tpu.memory_space<vmem>>) attributes {dimension_semantics = [#tpu.dimension_semantics<parallel>, #tpu.dimension_semantics<arbitrary>], iteration_bounds = array<i64: 1, 1>, scalar_prefetch = 0 : i64, scratch_operands = 2 : i64, tpu.core_type = #tpu.core_type<tc>, window_params = [{transform_indices = @transform_0, window_bounds = array<i64: 16, 8, 32>}, {transform_indices = @transform_1, window_bounds = array<i64: 16, 8>}, {transform_indices = @transform_2, window_bounds = array<i64: 16, 32>}]} {
    %c0_i32 = arith.constant 0 : i32
    %0 = arith.cmpi eq, %arg1, %c0_i32 : i32
    %1 = arith.extui %0 : i1 to i32
    %c0_i32_0 = arith.constant 0 : i32
    %2 = arith.cmpi ne, %1, %c0_i32_0 : i32
    scf.if %2 {
      %cst_18 = arith.constant 0.000000e+00 : f32
      %28 = vector.broadcast %cst_18 : f32 to vector<16x32xf32>
      %c0_19 = arith.constant 0 : index
      %c0_20 = arith.constant 0 : index
      %29 = vector.load %arg5[%c0_19, %c0_20] : memref<16x32xf32, #tpu.memory_space<vmem>>, vector<16x32xf32>
      tpu.vector_store %arg5[%c0_19, %c0_20], %28 {strides = array<i32>} : memref<16x32xf32, #tpu.memory_space<vmem>>, vector<16x32xf32>,
      %cst_21 = arith.constant 0.000000e+00 : f32
      %30 = vector.broadcast %cst_21 : f32 to vector<16x1xf32>
      %c0_22 = arith.constant 0 : index
      %c0_23 = arith.constant 0 : index
      %31 = vector.load %arg6[%c0_22, %c0_23] : memref<16x1xf32, #tpu.memory_space<vmem>>, vector<16x1xf32>
      tpu.vector_store %arg6[%c0_22, %c0_23], %30 {strides = array<i32>} : memref<16x1xf32, #tpu.memory_space<vmem>>, vector<16x1xf32>,
    } else {
    }
    %c0 = arith.constant 0 : index
    %c0_1 = arith.constant 0 : index
    %c0_2 = arith.constant 0 : index
    %3 = vector.load %arg2[%c0, %c0_1, %c0_2] : memref<16x8x32xf32, #tpu.memory_space<vmem>>, vector<16x8x32xf32>
    %c0_3 = arith.constant 0 : index
    %c0_4 = arith.constant 0 : index
    %4 = vector.load %arg3[%c0_3, %c0_4] : memref<16x8xf32, #tpu.memory_space<vmem>>, vector<16x8xf32>
    %cst = arith.constant 0.000000e+00 : f32
    %5 = vector.broadcast %cst : f32 to vector<16x8xf32>
    %6 = arith.cmpf one, %4, %5 : vector<16x8xf32>
    %7 = arith.extui %6 : vector<16x8xi1> to vector<16x8xi32>
    %8 = arith.sitofp %7 : vector<16x8xi32> to vector<16x8xf32>
    %c0_5 = arith.constant 0 : index
    %c0_6 = arith.constant 0 : index
    %9 = vector.load %arg5[%c0_5, %c0_6] : memref<16x32xf32, #tpu.memory_space<vmem>>, vector<16x32xf32>
    %10 = vector.shape_cast %8 : vector<16x8xf32> to vector<16x8x1xf32>
    %11 = vector.broadcast %10 : vector<16x8x1xf32> to vector<16x8x32xf32>
    %12 = arith.mulf %3, %11 : vector<16x8x32xf32>
    %cst_7 = arith.constant dense<0.000000e+00> : vector<16x32xf32>
    %13 = vector.multi_reduction <add>, %12, %cst_7 [1] : vector<16x8x32xf32> to vector<16x32xf32>
    %14 = arith.addf %9, %13 : vector<16x32xf32>
    %c0_8 = arith.constant 0 : index
    %c0_9 = arith.constant 0 : index
    %15 = vector.load %arg5[%c0_8, %c0_9] : memref<16x32xf32, #tpu.memory_space<vmem>>, vector<16x32xf32>
    tpu.vector_store %arg5[%c0_8, %c0_9], %14 {strides = array<i32>} : memref<16x32xf32, #tpu.memory_space<vmem>>, vector<16x32xf32>,
    %c0_10 = arith.constant 0 : index
    %c0_11 = arith.constant 0 : index
    %16 = vector.load %arg6[%c0_10, %c0_11] : memref<16x1xf32, #tpu.memory_space<vmem>>, vector<16x1xf32>
    %cst_12 = arith.constant 1.000000e+00 : f32
    %17 = vector.broadcast %cst_12 : f32 to vector<16x8xf32>
    %18 = arith.cmpf oeq, %4, %17 : vector<16x8xf32>
    %19 = arith.extui %18 : vector<16x8xi1> to vector<16x8xi32>
    %20 = arith.sitofp %19 : vector<16x8xi32> to vector<16x8xf32>
    %cst_13 = arith.constant dense<0.000000e+00> : vector<16xf32>
    %21 = vector.multi_reduction <add>, %20, %cst_13 [1] : vector<16x8xf32> to vector<16xf32>
    %22 = vector.shape_cast %21 : vector<16xf32> to vector<16x1xf32>
    %23 = arith.addf %16, %22 : vector<16x1xf32>
    %c0_14 = arith.constant 0 : index
    %c0_15 = arith.constant 0 : index
    %24 = vector.load %arg6[%c0_14, %c0_15] : memref<16x1xf32, #tpu.memory_space<vmem>>, vector<16x1xf32>
    tpu.vector_store %arg6[%c0_14, %c0_15], %23 {strides = array<i32>} : memref<16x1xf32, #tpu.memory_space<vmem>>, vector<16x1xf32>,
    %c0_i32_16 = arith.constant 0 : i32
    %25 = arith.cmpi eq, %arg1, %c0_i32_16 : i32
    %26 = arith.extui %25 : i1 to i32
    %c0_i32_17 = arith.constant 0 : i32
    %27 = arith.cmpi ne, %26, %c0_i32_17 : i32
    scf.if %27 {
      %c0_18 = arith.constant 0 : index
      %c0_19 = arith.constant 0 : index
      %28 = vector.load %arg6[%c0_18, %c0_19] : memref<16x1xf32, #tpu.memory_space<vmem>>, vector<16x1xf32>
      %cst_20 = arith.constant 1.000000e+00 : f32
      %29 = vector.broadcast %cst_20 : f32 to vector<16x1xf32>
      %30 = arith.maximumf %28, %29 : vector<16x1xf32>
      %c0_21 = arith.constant 0 : index
      %c0_22 = arith.constant 0 : index
      %31 = vector.load %arg5[%c0_21, %c0_22] : memref<16x32xf32, #tpu.memory_space<vmem>>, vector<16x32xf32>
      %32 = vector.broadcast %30 : vector<16x1xf32> to vector<16x32xf32>
      %33 = arith.divf %31, %32 : vector<16x32xf32>
      %c0_23 = arith.constant 0 : index
      %c0_24 = arith.constant 0 : index
      %34 = vector.load %arg4[%c0_23, %c0_24] : memref<16x32xf32, #tpu.memory_space<vmem>>, vector<16x32xf32>
      tpu.vector_store %arg4[%c0_23, %c0_24], %33 {strides = array<i32>} : memref<16x32xf32, #tpu.memory_space<vmem>>, vector<16x32xf32>,
    } else {
    }
    return
  }
  func.func @transform_0(%arg0: i32, %arg1: i32) -> (i32, i32, i32) {
    %c0_i32 = arith.constant 0 : i32
    %c0_i32_0 = arith.constant 0 : i32
    return %arg0, %arg1, %c0_i32 : i32, i32, i32
  }
  func.func @transform_1(%arg0: i32, %arg1: i32) -> (i32, i32) {
    %c0_i32 = arith.constant 0 : i32
    return %arg0, %arg1 : i32, i32
  }
  func.func @transform_2(%arg0: i32, %arg1: i32) -> (i32, i32) {
    %c0_i32 = arith.constant 0 : i32
    %c0_i32_0 = arith.constant 0 : i32
    return %arg0, %c0_i32 : i32, i32
  }
}

</mosaic_0001>

<llo_original>
// kernel: tpu_custom_call.1
$region0: #{tpu_custom_call.1}
  #allocation0 [shape = 'u32[]', space=smem, size = 0x4, offset = 0x4, fixed_abs, tag = 'smem constant byte address 0x4 - core index']
  #allocation1 [shape = 'u32[144,128]{1,0:T(1,128)}', space=vmem, size = 0x12000, scoped, tag = 'internal scratch']
  #allocation2 [shape = 'f32[16,32]{1,0:T(8,128)}', space=vmem, size = 0x2000, scoped, tag = 'scratch operand']
  #allocation3 [shape = 'f32[16,1]{1,0:T(8,128)}', space=vmem, size = 0x2000, scoped, tag = 'scratch operand']
  %s0 = inlined_call_operand.hbm [shape: f32[16,8,32], index: 0, kind: input, shape index: {}]
  %s1 = inlined_call_operand.vmem [shape: f32[16,8], index: 1, kind: input, shape index: {}]
  %s2 = inlined_call_operand.hbm [shape: f32[16,32], index: 2, kind: output, shape index: {}]
  %s3 = sld [smem:[#allocation0]]
  $region30: #{tpu_custom_call.1} parent=0
    _
  %s5 = ssub.s32 1, %s3
  %s6 = scalar_select 0, %s5, %s3
  $region1: #{tpu_custom_call.1} parent=0
    #allocation4 [shape = 'u8[65536]{0}', space=vmem, size = 0x10000, scoped, tag = 'input window, operand 0, single buffered']
    #allocation5 [shape = 's32[1]{0}', space=sflag, size = 0x4, scoped, tag = 'scoped memory for tpu_custom_call.1']
    #allocation6 [shape = 's32[1]{0}', space=sflag, size = 0x4, scoped, tag = 'scoped memory for tpu_custom_call.1']
    #allocation7 [shape = 'u8[8192]{0}', space=vmem, size = 0x2000, scoped, tag = 'output window, operand 0, single buffered']
    %7 = vsyncpa [#allocation5], 0
    %8 = vsyncpa [#allocation6], 0
    // Predicated region
    $region2: #{tpu_custom_call.1} parent=1 // pred_check
      _
    $region3: #{tpu_custom_call.1} parent=1 // pred_check_branch
      %10 = sbr.rel (0) target = $region5
    $region4: #{tpu_custom_call.1} parent=1 // pred_region
      %s12 = ssub.s32 2048, 2048
      %13 = vsyncadd [#allocation5], %s12
      %s14 = sshll.u32 [#allocation4], 4
      %s15 = int_to_ptr.vmem [resolvable:$true] %s14
      %20 = dma.hbm_to_vmem [thread:$0]  %s0, 2048, %s15, [#allocation5], 128, 128, 8
    $region5: #{tpu_custom_call.1} parent=1 // pred_fallthru
      _
    // Predicated region
    $region6: #{tpu_custom_call.1} parent=1 // pred_check
      _
    $region7: #{tpu_custom_call.1} parent=1 // pred_check_branch
      %22 = sbr.rel (0) target = $region9
    $region8: #{tpu_custom_call.1} parent=1 // pred_region
      _
    $region9: #{tpu_custom_call.1} parent=1 // pred_fallthru
      _
    // Predicated region
    $region10: #{tpu_custom_call.1} parent=1 // pred_check
      _
    $region11: #{tpu_custom_call.1} parent=1 // pred_check_branch
      %24 = sbr.rel (0) target = $region13
    $region12: #{tpu_custom_call.1} parent=1 // pred_region
      %25 = dma.done [#allocation5], 2048
    $region13: #{tpu_custom_call.1} parent=1 // pred_fallthru
      _
    %p26 = scmp.eq.s32.totalorder 0, 0
    // Predicated region
    $region14: #{tpu_custom_call.1} parent=1 // pred_check
      %p27 = pneg %p26
    $region15: #{tpu_custom_call.1} parent=1 // pred_check_branch
      %29 = sbr.rel (%p27) target = $region17
    $region16: #{tpu_custom_call.1} parent=1 // pred_region
      %vm30 = vcmask 261120
      %31 = vst.msk [vmem:[#allocation2] sm:$0xff] %vm30, 0.0
      %32 = vst.msk [vmem:[#allocation2 + $0x8] sm:$0xff] %vm30, 0.0
      %vm33 = vcmask 7168
      %34 = vst.msk [vmem:[#allocation3] sm:$0xff] %vm33, 0.0
      %35 = vst.msk [vmem:[#allocation3 + $0x8] sm:$0xff] %vm33, 0.0
    $region17: #{tpu_custom_call.1} parent=1 // pred_fallthru
      _
    %v36 = vld [vmem:[#allocation4] sm:$0xff]
    %v37 = vld [vmem:[#allocation4 + $0x8] sm:$0xff]
    %v38 = vld [vmem:[#allocation4 + $0x10] sm:$0xff]
    %v39 = vld [vmem:[#allocation4 + $0x18] sm:$0xff]
    %v40 = vld [vmem:[#allocation4 + $0x20] sm:$0xff]
    %v41 = vld [vmem:[#allocation4 + $0x28] sm:$0xff]
    %v42 = vld [vmem:[#allocation4 + $0x30] sm:$0xff]
    %v43 = vld [vmem:[#allocation4 + $0x38] sm:$0xff]
    %v44 = vld [vmem:[#allocation4 + $0x40] sm:$0xff]
    %v45 = vld [vmem:[#allocation4 + $0x48] sm:$0xff]
    %v46 = vld [vmem:[#allocation4 + $0x50] sm:$0xff]
    %v47 = vld [vmem:[#allocation4 + $0x58] sm:$0xff]
    %v48 = vld [vmem:[#allocation4 + $0x60] sm:$0xff]
    %v49 = vld [vmem:[#allocation4 + $0x68] sm:$0xff]
    %v50 = vld [vmem:[#allocation4 + $0x70] sm:$0xff]
    %v51 = vld [vmem:[#allocation4 + $0x78] sm:$0xff]
    %v52 = vld [vmem:[%s1] sm:$0xff]
    %v53 = vld [vmem:[%s1 + $0x8] sm:$0xff]
    %vm54 = vcmp.ne.f32.partialorder %v52, 0.0
    %vm55 = vcmp.ne.f32.partialorder %v53, 0.0
    %v56 = vsel %vm54, 1, 0
    %v57 = vsel %vm55, 1, 0
    %v58 = vcvt.s32.f32 %v56
    %v59 = vcvt.s32.f32 %v57
    %v60 = vld [vmem:[#allocation2] sm:$0xff]
    %v61 = vld [vmem:[#allocation2 + $0x8] sm:$0xff]
    %v62 = vlaneseq
    %v63 = vshrl.u32 %v62, 7
    %v64 = vsub.s32 0, %v63
    %v65 = vrot.slane %v58, %v64
    %67 = vbcast.lane.b32.xlu0 %v65, 256
    %v68 = vpop.permute.xlu0 %67
    %v69 = vlaneseq
    %v70 = vshrl.u32 %v69, 7
    %v71 = vsub.s32 1, %v70
    %v72 = vrot.slane %v58, %v71
    %74 = vbcast.lane.b32.xlu0 %v72, 256
    %v75 = vpop.permute.xlu0 %74
    %v76 = vlaneseq
    %v77 = vshrl.u32 %v76, 7
    %v78 = vsub.s32 2, %v77
    %v79 = vrot.slane %v58, %v78
    %81 = vbcast.lane.b32.xlu0 %v79, 256
    %v82 = vpop.permute.xlu0 %81
    %v83 = vlaneseq
    %v84 = vshrl.u32 %v83, 7
    %v85 = vsub.s32 3, %v84
    %v86 = vrot.slane %v58, %v85
    %88 = vbcast.lane.b32.xlu0 %v86, 256
    %v89 = vpop.permute.xlu0 %88
    %v90 = vlaneseq
    %v91 = vshrl.u32 %v90, 7
    %v92 = vsub.s32 4, %v91
    %v93 = vrot.slane %v58, %v92
    %95 = vbcast.lane.b32.xlu0 %v93, 256
    %v96 = vpop.permute.xlu0 %95
    %v97 = vlaneseq
    %v98 = vshrl.u32 %v97, 7
    %v99 = vsub.s32 5, %v98
    %v100 = vrot.slane %v58, %v99
    %102 = vbcast.lane.b32.xlu0 %v100, 256
    %v103 = vpop.permute.xlu0 %102
    %v104 = vlaneseq
    %v105 = vshrl.u32 %v104, 7
    %v106 = vsub.s32 6, %v105
    %v107 = vrot.slane %v58, %v106
    %109 = vbcast.lane.b32.xlu0 %v107, 256
    %v110 = vpop.permute.xlu0 %109
    %v111 = vlaneseq
    %v112 = vshrl.u32 %v111, 7
    %v113 = vsub.s32 7, %v112
    %v114 = vrot.slane %v58, %v113
    %116 = vbcast.lane.b32.xlu0 %v114, 256
    %v117 = vpop.permute.xlu0 %116
    %v118 = vlaneseq
    %v119 = vshrl.u32 %v118, 7
    %v120 = vsub.s32 0, %v119
    %v121 = vrot.slane %v59, %v120
    %123 = vbcast.lane.b32.xlu0 %v121, 256
    %v124 = vpop.permute.xlu0 %123
    %v125 = vlaneseq
    %v126 = vshrl.u32 %v125, 7
    %v127 = vsub.s32 1, %v126
    %v128 = vrot.slane %v59, %v127
    %130 = vbcast.lane.b32.xlu0 %v128, 256
    %v131 = vpop.permute.xlu0 %130
    %v132 = vlaneseq
    %v133 = vshrl.u32 %v132, 7
    %v134 = vsub.s32 2, %v133
    %v135 = vrot.slane %v59, %v134
    %137 = vbcast.lane.b32.xlu0 %v135, 256
    %v138 = vpop.permute.xlu0 %137
    %v139 = vlaneseq
    %v140 = vshrl.u32 %v139, 7
    %v141 = vsub.s32 3, %v140
    %v142 = vrot.slane %v59, %v141
    %144 = vbcast.lane.b32.xlu0 %v142, 256
    %v145 = vpop.permute.xlu0 %144
    %v146 = vlaneseq
    %v147 = vshrl.u32 %v146, 7
    %v148 = vsub.s32 4, %v147
    %v149 = vrot.slane %v59, %v148
    %151 = vbcast.lane.b32.xlu0 %v149, 256
    %v152 = vpop.permute.xlu0 %151
    %v153 = vlaneseq
    %v154 = vshrl.u32 %v153, 7
    %v155 = vsub.s32 5, %v154
    %v156 = vrot.slane %v59, %v155
    %158 = vbcast.lane.b32.xlu0 %v156, 256
    %v159 = vpop.permute.xlu0 %158
    %v160 = vlaneseq
    %v161 = vshrl.u32 %v160, 7
    %v162 = vsub.s32 6, %v161
    %v163 = vrot.slane %v59, %v162
    %165 = vbcast.lane.b32.xlu0 %v163, 256
    %v166 = vpop.permute.xlu0 %165
    %v167 = vlaneseq
    %v168 = vshrl.u32 %v167, 7
    %v169 = vsub.s32 7, %v168
    %v170 = vrot.slane %v59, %v169
    %172 = vbcast.lane.b32.xlu0 %v170, 256
    %v173 = vpop.permute.xlu0 %172
    %v174 = vmul.f32 %v36, %v68
    %v175 = vmul.f32 %v37, %v75
    %v176 = vmul.f32 %v38, %v82
    %v177 = vmul.f32 %v39, %v89
    %v178 = vmul.f32 %v40, %v96
    %v179 = vmul.f32 %v41, %v103
    %v180 = vmul.f32 %v42, %v110
    %v181 = vmul.f32 %v43, %v117
    %v182 = vmul.f32 %v44, %v124
    %v183 = vmul.f32 %v45, %v131
    %v184 = vmul.f32 %v46, %v138
    %v185 = vmul.f32 %v47, %v145
    %v186 = vmul.f32 %v48, %v152
    %v187 = vmul.f32 %v49, %v159
    %v188 = vmul.f32 %v50, %v166
    %v189 = vmul.f32 %v51, %v173
    %vm190 = vcmask 261120
    %v191 = vsel %vm190, %v174, 0.0
    %v192 = vrot.slane %v191, 4
    %v193 = vadd.f32 %v191, %v192
    %v194 = vrot.slane %v193, 2
    %v195 = vadd.f32 %v193, %v194
    %v196 = vrot.slane %v195, 1
    %v197 = vadd.f32 %v195, %v196
    %v198 = vsel %vm190, %v175, 0.0
    %v199 = vrot.slane %v198, 4
    %v200 = vadd.f32 %v198, %v199
    %v201 = vrot.slane %v200, 2
    %v202 = vadd.f32 %v200, %v201
    %v203 = vrot.slane %v202, 1
    %v204 = vadd.f32 %v202, %v203
    %v205 = vsel %vm190, %v176, 0.0
    %v206 = vrot.slane %v205, 4
    %v207 = vadd.f32 %v205, %v206
    %v208 = vrot.slane %v207, 2
    %v209 = vadd.f32 %v207, %v208
    %v210 = vrot.slane %v209, 1
    %v211 = vadd.f32 %v209, %v210
    %v212 = vsel %vm190, %v177, 0.0
    %v213 = vrot.slane %v212, 4
    %v214 = vadd.f32 %v212, %v213
    %v215 = vrot.slane %v214, 2
    %v216 = vadd.f32 %v214, %v215
    %v217 = vrot.slane %v216, 1
    %v218 = vadd.f32 %v216, %v217
    %v219 = vsel %vm190, %v178, 0.0
    %v220 = vrot.slane %v219, 4
    %v221 = vadd.f32 %v219, %v220
    %v222 = vrot.slane %v221, 2
    %v223 = vadd.f32 %v221, %v222
    %v224 = vrot.slane %v223, 1
    %v225 = vadd.f32 %v223, %v224
    %v226 = vsel %vm190, %v179, 0.0
    %v227 = vrot.slane %v226, 4
    %v228 = vadd.f32 %v226, %v227
    %v229 = vrot.slane %v228, 2
    %v230 = vadd.f32 %v228, %v229
    %v231 = vrot.slane %v230, 1
    %v232 = vadd.f32 %v230, %v231
    %v233 = vsel %vm190, %v180, 0.0
    %v234 = vrot.slane %v233, 4
    %v235 = vadd.f32 %v233, %v234
    %v236 = vrot.slane %v235, 2
    %v237 = vadd.f32 %v235, %v236
    %v238 = vrot.slane %v237, 1
    %v239 = vadd.f32 %v237, %v238
    %v240 = vsel %vm190, %v181, 0.0
    %v241 = vrot.slane %v240, 4
    %v242 = vadd.f32 %v240, %v241
    %v243 = vrot.slane %v242, 2
    %v244 = vadd.f32 %v242, %v243
    %v245 = vrot.slane %v244, 1
    %v246 = vadd.f32 %v244, %v245
    %v247 = vsel %vm190, %v182, 0.0
    %v248 = vrot.slane %v247, 4
    %v249 = vadd.f32 %v247, %v248
    %v250 = vrot.slane %v249, 2
    %v251 = vadd.f32 %v249, %v250
    %v252 = vrot.slane %v251, 1
    %v253 = vadd.f32 %v251, %v252
    %v254 = vsel %vm190, %v183, 0.0
    %v255 = vrot.slane %v254, 4
    %v256 = vadd.f32 %v254, %v255
    %v257 = vrot.slane %v256, 2
    %v258 = vadd.f32 %v256, %v257
    %v259 = vrot.slane %v258, 1
    %v260 = vadd.f32 %v258, %v259
    %v261 = vsel %vm190, %v184, 0.0
    %v262 = vrot.slane %v261, 4
    %v263 = vadd.f32 %v261, %v262
    %v264 = vrot.slane %v263, 2
    %v265 = vadd.f32 %v263, %v264
    %v266 = vrot.slane %v265, 1
    %v267 = vadd.f32 %v265, %v266
    %v268 = vsel %vm190, %v185, 0.0
    %v269 = vrot.slane %v268, 4
    %v270 = vadd.f32 %v268, %v269
    %v271 = vrot.slane %v270, 2
    %v272 = vadd.f32 %v270, %v271
    %v273 = vrot.slane %v272, 1
    %v274 = vadd.f32 %v272, %v273
    %v275 = vsel %vm190, %v186, 0.0
    %v276 = vrot.slane %v275, 4
    %v277 = vadd.f32 %v275, %v276
    %v278 = vrot.slane %v277, 2
    %v279 = vadd.f32 %v277, %v278
    %v280 = vrot.slane %v279, 1
    %v281 = vadd.f32 %v279, %v280
    %v282 = vsel %vm190, %v187, 0.0
    %v283 = vrot.slane %v282, 4
    %v284 = vadd.f32 %v282, %v283
    %v285 = vrot.slane %v284, 2
    %v286 = vadd.f32 %v284, %v285
    %v287 = vrot.slane %v286, 1
    %v288 = vadd.f32 %v286, %v287
    %v289 = vsel %vm190, %v188, 0.0
    %v290 = vrot.slane %v289, 4
    %v291 = vadd.f32 %v289, %v290
    %v292 = vrot.slane %v291, 2
    %v293 = vadd.f32 %v291, %v292
    %v294 = vrot.slane %v293, 1
    %v295 = vadd.f32 %v293, %v294
    %v296 = vsel %vm190, %v189, 0.0
    %v297 = vrot.slane %v296, 4
    %v298 = vadd.f32 %v296, %v297
    %v299 = vrot.slane %v298, 2
    %v300 = vadd.f32 %v298, %v299
    %v301 = vrot.slane %v300, 1
    %v302 = vadd.f32 %v300, %v301
    %vm319 = vcmask 1041409
    %v320 = vsel %vm319, %v204, %v197
    %vm321 = vcmask 1042434
    %v322 = vsel %vm321, %v211, %v320
    %vm323 = vcmask 1043459
    %v324 = vsel %vm323, %v218, %v322
    %vm325 = vcmask 1044484
    %v326 = vsel %vm325, %v225, %v324
    %vm327 = vcmask 1045509
    %v328 = vsel %vm327, %v232, %v326
    %vm329 = vcmask 1046534
    %v330 = vsel %vm329, %v239, %v328
    %vm331 = vcmask 1047559
    %v332 = vsel %vm331, %v246, %v330
    %v333 = vsel %vm319, %v260, %v253
    %v334 = vsel %vm321, %v267, %v333
    %v335 = vsel %vm323, %v274, %v334
    %v336 = vsel %vm325, %v281, %v335
    %v337 = vsel %vm327, %v288, %v336
    %v338 = vsel %vm329, %v295, %v337
    %v339 = vsel %vm331, %v302, %v338
    %v342 = vadd.f32 %v60, %v332
    %v343 = vadd.f32 %v61, %v339
    %344 = vst.msk [vmem:[#allocation2] sm:$0xff] %vm190, %v342
    %345 = vst.msk [vmem:[#allocation2 + $0x8] sm:$0xff] %vm190, %v343
    %v346 = vld [vmem:[#allocation3] sm:$0xff]
    %v347 = vld [vmem:[#allocation3 + $0x8] sm:$0xff]
    %vm348 = vcmp.eq.f32.partialorder %v52, 1.0
    %vm349 = vcmp.eq.f32.partialorder %v53, 1.0
    %v350 = vsel %vm348, 1, 0
    %v351 = vsel %vm349, 1, 0
    %v352 = vcvt.s32.f32 %v350
    %v353 = vcvt.s32.f32 %v351
    %vm354 = vcmask 64512
    %v355 = vsel %vm354, %v352, 0.0
    %356 = vadd.xlane.f32.xlu0 %v355
    %v357 = vpop.xlane.xlu0 %356
    %v358 = vsel %vm354, %v353, 0.0
    %359 = vadd.xlane.f32.xlu0 %v358
    %v360 = vpop.xlane.xlu0 %359
    %v361 = vadd.f32 %v346, %v357
    %v362 = vadd.f32 %v347, %v360
    %vm363 = vcmask 7168
    %364 = vst.msk [vmem:[#allocation3] sm:$0xff] %vm363, %v361
    %365 = vst.msk [vmem:[#allocation3 + $0x8] sm:$0xff] %vm363, %v362
    // Predicated region
    $region18: #{tpu_custom_call.1} parent=1 // pred_check
      %p366 = pneg %p26
    $region19: #{tpu_custom_call.1} parent=1 // pred_check_branch
      %368 = sbr.rel (%p366) target = $region21
    $region20: #{tpu_custom_call.1} parent=1 // pred_region
      %v369 = vld [vmem:[#allocation3] sm:$0xff]
      %v370 = vld [vmem:[#allocation3 + $0x8] sm:$0xff]
      %v371 = vmax.f32 %v369, 1.0
      %v372 = vmax.f32 %v370, 1.0
      %v373 = vld [vmem:[#allocation2] sm:$0xff]
      %v374 = vld [vmem:[#allocation2 + $0x8] sm:$0xff]
      %376 = vset.pattern.permute.xlu0 0
      %377 = vperm.xlu0 %376, %v371
      %v378 = vpop.permute.xlu0 %377
      %381 = vset.pattern.permute.xlu0 0
      %382 = vperm.xlu0 %381, %v372
      %v383 = vpop.permute.xlu0 %382
      %v385 = vrcp.pop %v378
      %v386 = vmul.f32 %v373, %v385
      %v387 = vrcp.pop %v383
      %v388 = vmul.f32 %v374, %v387
      %389 = vst.msk [vmem:[#allocation7] sm:$0xff] %vm190, %v386
      %390 = vst.msk [vmem:[#allocation7 + $0x8] sm:$0xff] %vm190, %v388
    $region21: #{tpu_custom_call.1} parent=1 // pred_fallthru
      _
    // Predicated region
    $region22: #{tpu_custom_call.1} parent=1 // pred_check
      _
    $region23: #{tpu_custom_call.1} parent=1 // pred_check_branch
      %392 = sbr.rel (0) target = $region25
    $region24: #{tpu_custom_call.1} parent=1 // pred_region
      %s394 = ssub.s32 256, 256
      %395 = vsyncadd [#allocation6], %s394
      %s396 = sshll.u32 [#allocation7], 4
      %s397 = int_to_ptr.vmem [resolvable:$true] %s396
      %402 = dma.vmem_to_hbm [thread:$0]  %s397, 256, %s2, [#allocation6], 128, 128, 8
    $region25: #{tpu_custom_call.1} parent=1 // pred_fallthru
      _
    // Predicated region
    $region26: #{tpu_custom_call.1} parent=1 // pred_check
      _
    $region27: #{tpu_custom_call.1} parent=1 // pred_check_branch
      %404 = sbr.rel (0) target = $region29
    $region28: #{tpu_custom_call.1} parent=1 // pred_region
      %405 = dma.done [#allocation6], 256
    $region29: #{tpu_custom_call.1} parent=1 // pred_fallthru
      _
    %406 = vsyncpa [#allocation5], 1
    %407 = vsyncpa [#allocation6], 1

</llo_original>
